<compile_context>
chip_gen: v7x
topology: tpu7x:2x2x1
jax: 0.10.0
libtpu: 0.0.40
codegen_flags: <defaults>
</compile_context>

<pallas_src>
import functools

import jax
import jax.numpy as jnp
from jax.experimental import pallas as pl
from jax.experimental.pallas import tpu as pltpu

_LANE_CANDIDATES = (1024, 512, 256, 128)   # lane-dense last dims (multiples of 128)
_TILE_BYTES = 4 << 20                      # ~4 MiB per tile buffer, all dtypes
_VMEM_LIMIT_BYTES = 40 << 20               # 2 bufs x (in+out) x 4 MiB = 16 MiB live


def _shift_kernel(x_ref, o_ref, *, shift):
    # Pure VPU elementwise add of a compile-time immediate.
    o_ref[...] = x_ref[...] + shift


def _zero_mean_pallas(x, shift):
    """Returns x + shift (same shape/dtype), via a lane-dense Pallas kernel."""
    dtype = x.dtype
    itemsize = jnp.dtype(dtype).itemsize
    total = x.size
    orig_shape = x.shape

    if total == 0:
        return x

    # Sublane packing granularity: f32 -> 8, bf16 -> 16, int8/fp8 -> 32.
    sub_mult = 8 * max(1, 4 // itemsize)

    # Widest lane count that divides total exactly -> free (metadata-only) reshape.
    lanes = None
    for cand in _LANE_CANDIDATES:
        if total % cand == 0:
            lanes = cand
            break
    if lanes is None:
        # Ragged total: a single elementwise add in XLA is cheaper than
        # materializing a padded copy of the whole tensor just to feed the kernel.
        return x + jnp.asarray(shift, dtype=dtype)

    rows = total // lanes
    x2d = x.reshape(rows, lanes)  # contiguous reshape: no HBM traffic

    if rows <= sub_mult:
        # Block equals full array dims -> exempt from the (8,128) divisibility rule.
        tile_r = rows
    else:
        # Byte-based tile sizing, rounded down to the sublane multiple.
        tile_r = max(sub_mult,
                     (_TILE_BYTES // (lanes * itemsize)) // sub_mult * sub_mult)
        tile_r = min(tile_r, (rows // sub_mult) * sub_mult)
        # Keep at least 2 grid programs so v7x's two TensorCores share the work.
        if pl.cdiv(rows, tile_r) < 2 and rows >= 2 * sub_mult:
            half = pl.cdiv(rows, 2)
            tile_r = max(sub_mult, ((half + sub_mult - 1) // sub_mult) * sub_mult)

    grid = (pl.cdiv(rows, tile_r),)  # last block may be partial; Pallas masks it

    y2d = pl.pallas_call(
        functools.partial(_shift_kernel, shift=float(shift)),
        out_shape=jax.ShapeDtypeStruct((rows, lanes), dtype),
        grid=grid,
        in_specs=[pl.BlockSpec((tile_r, lanes), lambda i: (i, 0))],
        out_specs=pl.BlockSpec((tile_r, lanes), lambda i: (i, 0)),
        compiler_params=pltpu.CompilerParams(
            dimension_semantics=("parallel",),
            vmem_limit_bytes=_VMEM_LIMIT_BYTES),
        cost_estimate=pl.CostEstimate(
            flops=total,
            transcendentals=0,
            bytes_accessed=2 * total * itemsize),
    )(x2d)

    return y2d.reshape(orig_shape)


def zero_mean_transform(x, logpx=None, reverse=False):
    """JAX/Pallas equivalent of ZeroMeanTransform.forward.

    x: any-shaped float array (e.g. NCHW).
    logpx: optional array, passed through unchanged.
    reverse: Python bool, selects +0.5 vs -0.5 (baked at trace time).
    """
    shift = 0.5 if reverse else -0.5
    y = _zero_mean_pallas(x, shift)
    if logpx is None:
        return y
    return (y, logpx)


if __name__ == "__main__":
    key = jax.random.PRNGKey(0)
    kx, kl = jax.random.split(key)

    # Small NCHW input consistent with an image-flow module.
    x = jax.random.uniform(kx, (2, 4, 16, 16), dtype=jnp.float32)
    logpx = jax.random.normal(kl, (2, 1), dtype=jnp.float32)

    # forward (reverse=False), no logpx
    y = zero_mean_transform(x)
    jax.block_until_ready(y)
    assert y.shape == x.shape and y.dtype == x.dtype
    assert jnp.allclose(y, x - 0.5, atol=1e-6)

    # forward with logpx
    y2, lp2 = zero_mean_transform(x, logpx)
    jax.block_until_ready(y2)
    assert jnp.allclose(y2, x - 0.5, atol=1e-6)
    assert jnp.array_equal(lp2, logpx)

    # reverse
    xr, lpr = zero_mean_transform(x, logpx, reverse=True)
    jax.block_until_ready(xr)
    assert jnp.allclose(xr, x + 0.5, atol=1e-6)
    assert jnp.array_equal(lpr, logpx)

    # bf16 path (exercises the 16-row sublane-packing granularity)
    xb = x.astype(jnp.bfloat16)
    yb = zero_mean_transform(xb)
    jax.block_until_ready(yb)
    assert yb.dtype == jnp.bfloat16
    assert jnp.allclose(yb.astype(jnp.float32), xb.astype(jnp.float32) - 0.5,
                        atol=1e-2)

    # Larger input: exercises the >=2-program grid split (megacore path).
    xbig = jax.random.uniform(jax.random.PRNGKey(1), (8, 3, 64, 64),
                              dtype=jnp.float32)
    ybig = zero_mean_transform(xbig)
    jax.block_until_ready(ybig)
    assert jnp.allclose(ybig, xbig - 0.5, atol=1e-6)

    # Lane divisor < 1024 (1536 elements -> lanes=512 path, no padding).
    xmid = jax.random.uniform(jax.random.PRNGKey(2), (2, 3, 16, 16),
                              dtype=jnp.float32)
    ymid = zero_mean_transform(xmid)
    jax.block_until_ready(ymid)
    assert jnp.allclose(ymid, xmid - 0.5, atol=1e-6)

    # Truly ragged total (35 elements) -> fused XLA fallback path.
    xrag = jax.random.uniform(jax.random.PRNGKey(3), (5, 7), dtype=jnp.float32)
    yrag = zero_mean_transform(xrag)
    jax.block_until_ready(yrag)
    assert jnp.allclose(yrag, xrag - 0.5, atol=1e-6)

    print("KERNEL_OK")
</pallas_src>

<mosaic_0001>
module attributes {stable_mosaic.version = 11 : i64} {
  func.func @_shift_kernel(%arg0: i32, %arg1: memref<2x1024xf32, #tpu.memory_space<vmem>>, %arg2: memref<2x1024xf32, #tpu.memory_space<vmem>>) attributes {dimension_semantics = [#tpu.dimension_semantics<parallel>], iteration_bounds = array<i64: 1>, scalar_prefetch = 0 : i64, scratch_operands = 0 : i64, tpu.core_type = #tpu.core_type<tc>, window_params = [{transform_indices = @transform_0, window_bounds = array<i64: 2, 1024>}, {transform_indices = @transform_1, window_bounds = array<i64: 2, 1024>}]} {
    %c0 = arith.constant 0 : index
    %c0_0 = arith.constant 0 : index
    %0 = vector.load %arg1[%c0, %c0_0] : memref<2x1024xf32, #tpu.memory_space<vmem>>, vector<2x1024xf32>
    %cst = arith.constant -5.000000e-01 : f32
    %1 = vector.broadcast %cst : f32 to vector<2x1024xf32>
    %2 = arith.addf %0, %1 : vector<2x1024xf32>
    %c0_1 = arith.constant 0 : index
    %c0_2 = arith.constant 0 : index
    %3 = vector.load %arg2[%c0_1, %c0_2] : memref<2x1024xf32, #tpu.memory_space<vmem>>, vector<2x1024xf32>
    tpu.vector_store %arg2[%c0_1, %c0_2], %2 {strides = array<i32>} : memref<2x1024xf32, #tpu.memory_space<vmem>>, vector<2x1024xf32>,
    return
  }
  func.func @transform_0(%arg0: i32) -> (i32, i32) {
    %c0_i32 = arith.constant 0 : i32
    %c0_i32_0 = arith.constant 0 : i32
    return %arg0, %c0_i32 : i32, i32
  }
  func.func @transform_1(%arg0: i32) -> (i32, i32) {
    %c0_i32 = arith.constant 0 : i32
    %c0_i32_0 = arith.constant 0 : i32
    return %arg0, %c0_i32 : i32, i32
  }
}

</mosaic_0001>

<llo_original>
// kernel: tpu_custom_call.1
$region0: #{tpu_custom_call.1}
  #allocation0 [shape = 'u32[]', space=smem, size = 0x4, offset = 0x4, fixed_abs, tag = 'smem constant byte address 0x4 - core index']
  #allocation1 [shape = 'u32[144,128]{1,0:T(1,128)}', space=vmem, size = 0x12000, scoped, tag = 'internal scratch']
  %s0 = inlined_call_operand.hbm [shape: f32[2,1024], index: 0, kind: input, shape index: {}]
  %s1 = inlined_call_operand.hbm [shape: f32[2,1024], index: 1, kind: output, shape index: {}]
  %s2 = sld [smem:[#allocation0]]
  $region18: #{tpu_custom_call.1} parent=0
    _
  %s4 = ssub.s32 1, %s2
  %s5 = scalar_select 0, %s4, %s2
  $region1: #{tpu_custom_call.1} parent=0
    #allocation2 [shape = 'u8[8192]{0}', space=vmem, size = 0x2000, scoped, tag = 'input window, operand 0, single buffered']
    #allocation3 [shape = 's32[1]{0}', space=sflag, size = 0x4, scoped, tag = 'scoped memory for tpu_custom_call.1']
    #allocation4 [shape = 's32[1]{0}', space=sflag, size = 0x4, scoped, tag = 'scoped memory for tpu_custom_call.1']
    #allocation5 [shape = 'u8[8192]{0}', space=vmem, size = 0x2000, scoped, tag = 'output window, operand 0, single buffered']
    %6 = vsyncpa [#allocation3], 0
    %7 = vsyncpa [#allocation4], 0
    // Predicated region
    $region2: #{tpu_custom_call.1} parent=1 // pred_check
      _
    $region3: #{tpu_custom_call.1} parent=1 // pred_check_branch
      %9 = sbr.rel (0) target = $region5
    $region4: #{tpu_custom_call.1} parent=1 // pred_region
      %s11 = ssub.s32 256, 256
      %12 = vsyncadd [#allocation3], %s11
      %s14 = sshll.u32 [#allocation2], 4
      %s15 = int_to_ptr.vmem [resolvable:$true] %s14
      %17 = dma.hbm_to_vmem [thread:$0]  %s0, 256, %s15, [#allocation3]
    $region5: #{tpu_custom_call.1} parent=1 // pred_fallthru
      _
    // Predicated region
    $region6: #{tpu_custom_call.1} parent=1 // pred_check
      _
    $region7: #{tpu_custom_call.1} parent=1 // pred_check_branch
      %19 = sbr.rel (0) target = $region9
    $region8: #{tpu_custom_call.1} parent=1 // pred_region
      %20 = dma.done [#allocation3], 256
    $region9: #{tpu_custom_call.1} parent=1 // pred_fallthru
      _
    %v21 = vld [vmem:[#allocation2] sm:$0xff]
    %v22 = vld [vmem:[#allocation2 + $0x8] sm:$0xff]
    %v23 = vadd.f32 %v21, -0.5
    %v24 = vadd.f32 %v22, -0.5
    %25 = vst [vmem:[#allocation5] sm:$0xff] %v23
    %26 = vst [vmem:[#allocation5 + $0x8] sm:$0xff] %v24
    // Predicated region
    $region10: #{tpu_custom_call.1} parent=1 // pred_check
      _
    $region11: #{tpu_custom_call.1} parent=1 // pred_check_branch
      %28 = sbr.rel (0) target = $region13
    $region12: #{tpu_custom_call.1} parent=1 // pred_region
      %s30 = ssub.s32 256, 256
      %31 = vsyncadd [#allocation4], %s30
      %s33 = sshll.u32 [#allocation5], 4
      %s34 = int_to_ptr.vmem [resolvable:$true] %s33
      %36 = dma.vmem_to_hbm [thread:$0]  %s34, 256, %s1, [#allocation4]
    $region13: #{tpu_custom_call.1} parent=1 // pred_fallthru
      _
    // Predicated region
    $region14: #{tpu_custom_call.1} parent=1 // pred_check
      _
    $region15: #{tpu_custom_call.1} parent=1 // pred_check_branch
      %38 = sbr.rel (0) target = $region17
    $region16: #{tpu_custom_call.1} parent=1 // pred_region
      %39 = dma.done [#allocation4], 256
    $region17: #{tpu_custom_call.1} parent=1 // pred_fallthru
      _
    %40 = vsyncpa [#allocation3], 1
    %41 = vsyncpa [#allocation4], 1

</llo_original>
